<compile_context>
chip_gen: v7x
topology: tpu7x:2x2x1
jax: 0.10.0
libtpu: 0.0.40
codegen_flags: <defaults>
</compile_context>

<pallas_src>
import functools
import math

import jax
import jax.numpy as jnp
from jax.experimental import pallas as pl
from jax.experimental.pallas import tpu as pltpu


def pos_enc_kernel(x_ref, pe_ref, o_ref, *, batch):
    # x_ref / o_ref: (ts*batch, d) rows in (seq-major, batch-minor) order.
    # pe_ref: (ts, d). Each PE row broadcasts over `batch` consecutive rows.
    pe = pe_ref[...]
    if batch > 1:
        pe = jnp.repeat(pe, batch, axis=0)  # sublane broadcast; XLU has slack
    o_ref[...] = x_ref[...] + pe
    # TODO(synk): nn.Dropout(p=args.dropout) omitted (eval-mode identity); a
    # training variant would fuse the mask here via pltpu.prng_seed +
    # pltpu.prng_random_bits plus the 1/(1-p) scale.


def make_pe_table(max_len, d_model, dtype=jnp.float32):
    """Sin/cos table identical to the PyTorch buffer: shape (max_len, 1, d_model)."""
    position = jnp.arange(max_len, dtype=jnp.float32)[:, None]
    div_term = jnp.exp(
        jnp.arange(0, d_model, 2, dtype=jnp.float32) * (-math.log(10000.0) / d_model)
    )
    pe = jnp.zeros((max_len, d_model), jnp.float32)
    pe = pe.at[:, 0::2].set(jnp.sin(position * div_term))
    pe = pe.at[:, 1::2].set(jnp.cos(position * div_term))
    return pe.astype(dtype)[:, None, :]  # (max_len, 1, d_model)


def _choose_tile_seq(seq, batch, d, itemsize, vmem_budget_bytes):
    """Seq-tile length: VMEM-budgeted, sublane-aligned, >=2 tiles when possible."""
    row_mult = 8 * max(1, 4 // itemsize)      # 8 (f32), 16 (bf16), 32 (int8)
    d_pad = pl.cdiv(d, 128) * 128             # lane padding inside VMEM
    # Double-buffered x-in + out + pe blocks, per sequence position.
    per_seq_bytes = 2 * itemsize * d_pad * (2 * batch + 1)
    ts = max(row_mult, (vmem_budget_bytes // per_seq_bytes) // row_mult * row_mult)
    if ts >= seq:
        if seq >= 2 * row_mult:
            # Split into >=2 tiles so both v7x TensorCores get work.
            ts = min(seq, pl.cdiv(pl.cdiv(seq, 2), row_mult) * row_mult)
        else:
            ts = seq  # single full-extent block (always legal)
    return ts


def positional_encoding(x, pe, *, vmem_budget_bytes=12 * 1024 * 1024):
    """x: [seq, batch, d_model]; pe: [max_len, 1, d_model]. Returns x + pe[:seq]."""
    seq, batch, d = x.shape
    max_len = pe.shape[0]
    if seq > max_len:
        raise ValueError(f"seq ({seq}) exceeds pos_max_len ({max_len})")
    if pe.shape[2] != d:
        raise ValueError("d_model mismatch between x and pe")

    itemsize = jnp.dtype(x.dtype).itemsize

    # Tiny ops on the PE table only (never a full HBM pass over x).
    pe_s = pe[:seq, 0, :].astype(x.dtype)      # (seq, d)
    # Free view: merge leading dims so sublanes are densely packed.
    x2 = x.reshape(seq * batch, d)

    ts = _choose_tile_seq(seq, batch, d, itemsize, vmem_budget_bytes)
    grid = (pl.cdiv(seq, ts),)

    cost = pl.CostEstimate(
        flops=seq * batch * d,
        transcendentals=0,
        bytes_accessed=(2 * x.size + pe_s.size) * itemsize,
    )

    out = pl.pallas_call(
        functools.partial(pos_enc_kernel, batch=batch),
        out_shape=jax.ShapeDtypeStruct((seq * batch, d), x.dtype),
        grid_spec=pltpu.PrefetchScalarGridSpec(
            num_scalar_prefetch=0,
            grid=grid,
            in_specs=[
                pl.BlockSpec((ts * batch, d), lambda i: (i, 0)),  # x rows
                pl.BlockSpec((ts, d), lambda i: (i, 0)),          # pe rows
            ],
            out_specs=pl.BlockSpec((ts * batch, d), lambda i: (i, 0)),
        ),
        compiler_params=pltpu.CompilerParams(
            dimension_semantics=("parallel",),
            vmem_limit_bytes=32 * 1024 * 1024,
        ),
        cost_estimate=cost,
    )(x2, pe_s)

    return out.reshape(seq, batch, d)


if __name__ == "__main__":
    # Shapes implied by the module: seq-first activations [seq, batch, d_model].
    seq, batch, d_model, max_len = 8, 2, 128, 16

    key = jax.random.PRNGKey(0)
    x = jax.random.normal(key, (seq, batch, d_model), jnp.float32)
    pe = make_pe_table(max_len, d_model)

    out = jax.block_until_ready(positional_encoding(x, pe))

    # Pure-JAX reference (eval-mode dropout == identity).
    ref = x + pe[:seq]
    assert out.shape == (seq, batch, d_model)
    assert jnp.allclose(out, ref, atol=1e-6, rtol=1e-6)

    # Second shape: non-128-multiple d_model and a partial last seq tile
    # (exercises masked lane store + multi-tile grid, no pad/slice needed).
    seq2, batch2, d2, max_len2 = 20, 2, 96, 32
    x2 = jax.random.normal(jax.random.PRNGKey(1), (seq2, batch2, d2), jnp.float32)
    pe2 = make_pe_table(max_len2, d2)
    out2 = jax.block_until_ready(positional_encoding(x2, pe2))
    ref2 = x2 + pe2[:seq2]
    assert out2.shape == (seq2, batch2, d2)
    assert jnp.allclose(out2, ref2, atol=1e-6, rtol=1e-6)

    print("KERNEL_OK")
</pallas_src>

<mosaic_0001>
module attributes {stable_mosaic.version = 11 : i64} {
  func.func @pos_enc_kernel(%arg0: i32, %arg1: memref<16x128xf32, #tpu.memory_space<vmem>>, %arg2: memref<8x128xf32, #tpu.memory_space<vmem>>, %arg3: memref<16x128xf32, #tpu.memory_space<vmem>>) attributes {dimension_semantics = [#tpu.dimension_semantics<parallel>], iteration_bounds = array<i64: 1>, scalar_prefetch = 0 : i64, scratch_operands = 0 : i64, tpu.core_type = #tpu.core_type<tc>, window_params = [{transform_indices = @transform_0, window_bounds = array<i64: 16, 128>}, {transform_indices = @transform_1, window_bounds = array<i64: 8, 128>}, {transform_indices = @transform_2, window_bounds = array<i64: 16, 128>}]} {
    %c0 = arith.constant 0 : index
    %c0_0 = arith.constant 0 : index
    %0 = vector.load %arg2[%c0, %c0_0] : memref<8x128xf32, #tpu.memory_space<vmem>>, vector<8x128xf32>
    %1 = vector.shape_cast %0 : vector<8x128xf32> to vector<8x1x128xf32>
    %2 = vector.broadcast %1 : vector<8x1x128xf32> to vector<8x2x128xf32>
    %3 = vector.shape_cast %2 : vector<8x2x128xf32> to vector<16x128xf32>
    %c0_1 = arith.constant 0 : index
    %c0_2 = arith.constant 0 : index
    %4 = vector.load %arg1[%c0_1, %c0_2] : memref<16x128xf32, #tpu.memory_space<vmem>>, vector<16x128xf32>
    %5 = arith.addf %4, %3 : vector<16x128xf32>
    %c0_3 = arith.constant 0 : index
    %c0_4 = arith.constant 0 : index
    %6 = vector.load %arg3[%c0_3, %c0_4] : memref<16x128xf32, #tpu.memory_space<vmem>>, vector<16x128xf32>
    tpu.vector_store %arg3[%c0_3, %c0_4], %5 {strides = array<i32>} : memref<16x128xf32, #tpu.memory_space<vmem>>, vector<16x128xf32>,
    return
  }
  func.func @transform_0(%arg0: i32) -> (i32, i32) {
    %c0_i32 = arith.constant 0 : i32
    %c0_i32_0 = arith.constant 0 : i32
    return %arg0, %c0_i32 : i32, i32
  }
  func.func @transform_1(%arg0: i32) -> (i32, i32) {
    %c0_i32 = arith.constant 0 : i32
    %c0_i32_0 = arith.constant 0 : i32
    return %arg0, %c0_i32 : i32, i32
  }
  func.func @transform_2(%arg0: i32) -> (i32, i32) {
    %c0_i32 = arith.constant 0 : i32
    %c0_i32_0 = arith.constant 0 : i32
    return %arg0, %c0_i32 : i32, i32
  }
}

</mosaic_0001>

<llo_original>
// kernel: tpu_custom_call.1
$region0: #{tpu_custom_call.1}
  #allocation0 [shape = 'u32[]', space=smem, size = 0x4, offset = 0x4, fixed_abs, tag = 'smem constant byte address 0x4 - core index']
  #allocation1 [shape = 'u32[144,128]{1,0:T(1,128)}', space=vmem, size = 0x12000, scoped, tag = 'internal scratch']
  %s0 = inlined_call_operand.hbm [shape: f32[16,128], index: 0, kind: input, shape index: {}]
  %s1 = inlined_call_operand.hbm [shape: f32[8,128], index: 1, kind: input, shape index: {}]
  %s2 = inlined_call_operand.hbm [shape: f32[16,128], index: 2, kind: output, shape index: {}]
  %s3 = sld [smem:[#allocation0]]
  $region26: #{tpu_custom_call.1} parent=0
    _
  %s5 = ssub.s32 1, %s3
  %s6 = scalar_select 0, %s5, %s3
  $region1: #{tpu_custom_call.1} parent=0
    #allocation2 [shape = 'u8[8192]{0}', space=vmem, size = 0x2000, scoped, tag = 'input window, operand 0, single buffered']
    #allocation3 [shape = 's32[1]{0}', space=sflag, size = 0x4, scoped, tag = 'scoped memory for tpu_custom_call.1']
    #allocation4 [shape = 's32[1]{0}', space=sflag, size = 0x4, scoped, tag = 'scoped memory for tpu_custom_call.1']
    #allocation5 [shape = 'u8[4096]{0}', space=vmem, size = 0x1000, scoped, tag = 'input window, operand 1, single buffered']
    #allocation6 [shape = 's32[1]{0}', space=sflag, size = 0x4, scoped, tag = 'scoped memory for tpu_custom_call.1']
    #allocation7 [shape = 'u8[8192]{0}', space=vmem, size = 0x2000, scoped, tag = 'output window, operand 0, single buffered']
    %7 = vsyncpa [#allocation3], 0
    %8 = vsyncpa [#allocation6], 0
    %9 = vsyncpa [#allocation4], 0
    // Predicated region
    $region2: #{tpu_custom_call.1} parent=1 // pred_check
      _
    $region3: #{tpu_custom_call.1} parent=1 // pred_check_branch
      %11 = sbr.rel (0) target = $region5
    $region4: #{tpu_custom_call.1} parent=1 // pred_region
      %s13 = ssub.s32 256, 256
      %14 = vsyncadd [#allocation3], %s13
      %s15 = sshll.u32 [#allocation2], 4
      %s16 = int_to_ptr.vmem [resolvable:$true] %s15
      %21 = dma.hbm_to_vmem [thread:$0]  %s0, 256, %s16, [#allocation3], 128, 128, 8
    $region5: #{tpu_custom_call.1} parent=1 // pred_fallthru
      _
    // Predicated region
    $region6: #{tpu_custom_call.1} parent=1 // pred_check
      _
    $region7: #{tpu_custom_call.1} parent=1 // pred_check_branch
      %23 = sbr.rel (0) target = $region9
    $region8: #{tpu_custom_call.1} parent=1 // pred_region
      %s25 = ssub.s32 128, 128
      %26 = vsyncadd [#allocation6], %s25
      %s28 = sshll.u32 [#allocation5], 4
      %s29 = int_to_ptr.vmem [resolvable:$true] %s28
      %31 = dma.hbm_to_vmem [thread:$0]  %s1, 128, %s29, [#allocation6]
    $region9: #{tpu_custom_call.1} parent=1 // pred_fallthru
      _
    // Predicated region
    $region10: #{tpu_custom_call.1} parent=1 // pred_check
      _
    $region11: #{tpu_custom_call.1} parent=1 // pred_check_branch
      %33 = sbr.rel (0) target = $region13
    $region12: #{tpu_custom_call.1} parent=1 // pred_region
      %34 = dma.done [#allocation3], 256
    $region13: #{tpu_custom_call.1} parent=1 // pred_fallthru
      _
    // Predicated region
    $region14: #{tpu_custom_call.1} parent=1 // pred_check
      _
    $region15: #{tpu_custom_call.1} parent=1 // pred_check_branch
      %36 = sbr.rel (0) target = $region17
    $region16: #{tpu_custom_call.1} parent=1 // pred_region
      %37 = dma.done [#allocation6], 128
    $region17: #{tpu_custom_call.1} parent=1 // pred_fallthru
      _
    %v38 = vld [vmem:[#allocation5] sm:$0xff]
    %v40 = vcombine.high %v38, %v38
    %v42 = vunpack.c.l.s4 1966171168
    %v43 = vunpack.c.0.s8 %v42
    %v44 = vlaneseq
    %v45 = vshrl.u32 %v44, 7
    %v46 = vsub.s32 %v43, %v45
    %v47 = vrot.slane %v38, %v46
    %v49 = vunpack.c.l.s4 1966171168
    %v50 = vunpack.c.0.s8 %v49
    %v51 = vlaneseq
    %v52 = vshrl.u32 %v51, 7
    %v53 = vsub.s32 %v50, %v52
    %v54 = vrot.slane %v40, %v53
    %v55 = vcombine.high %v47, %v47
    %v56 = vcombine.high %v54, %v54
    %v58 = vunpack.c.l.s4 1966171168
    %v59 = vunpack.c.0.s8 %v58
    %v60 = vlaneseq
    %v61 = vshrl.u32 %v60, 7
    %v62 = vsub.s32 %v59, %v61
    %v63 = vrot.slane %v47, %v62
    %v65 = vunpack.c.l.s4 1966171168
    %v66 = vunpack.c.0.s8 %v65
    %v67 = vlaneseq
    %v68 = vshrl.u32 %v67, 7
    %v69 = vsub.s32 %v66, %v68
    %v70 = vrot.slane %v54, %v69
    %v72 = vunpack.c.l.s4 1966171168
    %v73 = vunpack.c.0.s8 %v72
    %v74 = vlaneseq
    %v75 = vshrl.u32 %v74, 7
    %v76 = vsub.s32 %v73, %v75
    %v77 = vrot.slane %v55, %v76
    %v79 = vunpack.c.l.s4 1966171168
    %v80 = vunpack.c.0.s8 %v79
    %v81 = vlaneseq
    %v82 = vshrl.u32 %v81, 7
    %v83 = vsub.s32 %v80, %v82
    %v84 = vrot.slane %v56, %v83
    %v85 = vcombine.high %v63, %v63
    %v86 = vcombine.high %v70, %v70
    %v87 = vcombine.high %v77, %v77
    %v88 = vcombine.high %v84, %v84
    %v89 = vlaneseq
    %v90 = vshrl.u32 %v89, 7
    %v91 = vsub.s32 0, %v90
    %v92 = vrot.slane %v63, %v91
    %v93 = vlaneseq
    %v94 = vshrl.u32 %v93, 7
    %v95 = vsub.s32 0, %v94
    %v96 = vrot.slane %v77, %v95
    %v97 = vlaneseq
    %v98 = vshrl.u32 %v97, 7
    %v99 = vsub.s32 0, %v98
    %v100 = vrot.slane %v85, %v99
    %v101 = vlaneseq
    %v102 = vshrl.u32 %v101, 7
    %v103 = vsub.s32 0, %v102
    %v104 = vrot.slane %v87, %v103
    %v105 = vlaneseq
    %v106 = vshrl.u32 %v105, 7
    %v107 = vsub.s32 0, %v106
    %v108 = vrot.slane %v70, %v107
    %v109 = vlaneseq
    %v110 = vshrl.u32 %v109, 7
    %v111 = vsub.s32 0, %v110
    %v112 = vrot.slane %v84, %v111
    %v113 = vlaneseq
    %v114 = vshrl.u32 %v113, 7
    %v115 = vsub.s32 0, %v114
    %v116 = vrot.slane %v86, %v115
    %v117 = vlaneseq
    %v118 = vshrl.u32 %v117, 7
    %v119 = vsub.s32 0, %v118
    %v120 = vrot.slane %v88, %v119
    %v121 = vld [vmem:[#allocation2] sm:$0xff]
    %v122 = vld [vmem:[#allocation2 + $0x8] sm:$0xff]
    %v123 = vcombine.low %v92, %v96
    %v124 = vcombine.low %v100, %v104
    %v126 = vunpack.c.l.s4 1983009808
    %v127 = vunpack.c.0.s8 %v126
    %v128 = vlaneseq
    %v129 = vshrl.u32 %v128, 7
    %v130 = vsub.s32 %v127, %v129
    %v131 = vrot.slane %v123, %v130
    %v133 = vunpack.c.l.s4 1983009808
    %v134 = vunpack.c.0.s8 %v133
    %v135 = vlaneseq
    %v136 = vshrl.u32 %v135, 7
    %v137 = vsub.s32 %v134, %v136
    %v138 = vrot.slane %v124, %v137
    %v139 = vcombine.low %v131, %v138
    %v140 = vcombine.low %v108, %v112
    %v141 = vcombine.low %v116, %v120
    %v143 = vunpack.c.l.s4 1983009808
    %v144 = vunpack.c.0.s8 %v143
    %v145 = vlaneseq
    %v146 = vshrl.u32 %v145, 7
    %v147 = vsub.s32 %v144, %v146
    %v148 = vrot.slane %v140, %v147
    %v150 = vunpack.c.l.s4 1983009808
    %v151 = vunpack.c.0.s8 %v150
    %v152 = vlaneseq
    %v153 = vshrl.u32 %v152, 7
    %v154 = vsub.s32 %v151, %v153
    %v155 = vrot.slane %v141, %v154
    %v156 = vcombine.low %v148, %v155
    %v159 = vadd.f32 %v121, %v139
    %v160 = vadd.f32 %v122, %v156
    %161 = vst [vmem:[#allocation7] sm:$0xff] %v159
    %162 = vst [vmem:[#allocation7 + $0x8] sm:$0xff] %v160
    // Predicated region
    $region18: #{tpu_custom_call.1} parent=1 // pred_check
      _
    $region19: #{tpu_custom_call.1} parent=1 // pred_check_branch
      %164 = sbr.rel (0) target = $region21
    $region20: #{tpu_custom_call.1} parent=1 // pred_region
      %s166 = ssub.s32 256, 256
      %167 = vsyncadd [#allocation4], %s166
      %s168 = sshll.u32 [#allocation7], 4
      %s169 = int_to_ptr.vmem [resolvable:$true] %s168
      %174 = dma.vmem_to_hbm [thread:$0]  %s169, 256, %s2, [#allocation4], 128, 128, 8
    $region21: #{tpu_custom_call.1} parent=1 // pred_fallthru
      _
    // Predicated region
    $region22: #{tpu_custom_call.1} parent=1 // pred_check
      _
    $region23: #{tpu_custom_call.1} parent=1 // pred_check_branch
      %176 = sbr.rel (0) target = $region25
    $region24: #{tpu_custom_call.1} parent=1 // pred_region
      %177 = dma.done [#allocation4], 256
    $region25: #{tpu_custom_call.1} parent=1 // pred_fallthru
      _
    %178 = vsyncpa [#allocation3], 1
    %179 = vsyncpa [#allocation6], 1
    %180 = vsyncpa [#allocation4], 1

</llo_original>
